<compile_context>
chip_gen: v6e
topology: v6e:2x2x1
jax: 0.10.0
libtpu: 0.0.40
codegen_flags: <defaults>
</compile_context>

<pallas_src>
import functools
import math

import jax
import jax.numpy as jnp
from jax.experimental import pallas as pl
from jax.experimental.pallas import tpu as pltpu

LANES = 128            # vreg lane width
MAX_BLOCK_ROWS = 4096  # (4096, 128) f32 block = 2 MiB per input per buffer
LOG2 = math.log(2.0)


def _bce_kernel(x_ref, y_ref, o_ref, acc_ref, *,
                n_valid_rows, n_full_blocks, blocks_per_core, block_rows):
    c = pl.program_id(0)            # TensorCore split ("parallel")
    i = pl.program_id(1)            # reduction axis  ("arbitrary")
    gb = c * blocks_per_core + i    # global block index

    @pl.when(i == 0)
    def _():
        acc_ref[...] = jnp.zeros_like(acc_ref)

    x = x_ref[...].astype(jnp.float32)
    y = y_ref[...].astype(jnp.float32)
    # Numerically stable BCE-with-logits:
    #   loss = max(x, 0) - x*y + log(1 + exp(-|x|))
    elem = jnp.maximum(x, 0.0) - x * y + jnp.log1p(jnp.exp(-jnp.abs(x)))

    # Hot path: fully valid block -> pure vector accumulate (VPU only).
    @pl.when(gb < n_full_blocks)
    def _():
        acc_ref[...] += elem

    # Cold path: ragged tail / clamped-excess block -> mask invalid rows.
    @pl.when(gb >= n_full_blocks)
    def _():
        row_ids = jax.lax.broadcasted_iota(jnp.int32, elem.shape, 0)
        global_row = gb * block_rows + row_ids
        acc_ref[...] += jnp.where(global_row < n_valid_rows, elem, 0.0)

    # Finalize: single cross-lane reduction per core.
    @pl.when(i == pl.num_programs(1) - 1)
    def _():
        o_ref[...] = jnp.sum(acc_ref[...]).reshape(1, 1, 1)


@jax.jit
def bce_with_logits_mean(pred, target):
    """Mean BCE-with-logits over all elements (== nn.BCEWithLogitsLoss())."""
    assert pred.shape == target.shape
    n_valid = pred.size

    x = pred.reshape(-1)   # metadata-only; keep original dtype in HBM
    y = target.reshape(-1)

    # Lane alignment: the only wrapper-side copy, and only when needed
    # (<=127 zeros; each padded element contributes exactly log(2), see below).
    n_pad = (-n_valid) % LANES
    if n_pad:
        x = jnp.pad(x, (0, n_pad))
        y = jnp.pad(y, (0, n_pad))

    rows = (n_valid + n_pad) // LANES
    x2 = x.reshape(rows, LANES)
    y2 = y.reshape(rows, LANES)

    block_rows = rows if rows <= MAX_BLOCK_ROWS else MAX_BLOCK_ROWS
    n_blocks = pl.cdiv(rows, block_rows)
    n_full_blocks = rows // block_rows          # blocks with no ragged rows

    num_cores = 2 if n_blocks >= 2 else 1       # megacore split (helps v7x)
    blocks_per_core = pl.cdiv(n_blocks, num_cores)

    def in_map(c, i):
        # Clamp so excess steps on the last core re-read an in-bounds block;
        # their contribution is masked to zero inside the kernel.
        return (jnp.minimum(c * blocks_per_core + i, n_blocks - 1), 0)

    kernel = functools.partial(
        _bce_kernel,
        n_valid_rows=rows,
        n_full_blocks=n_full_blocks,
        blocks_per_core=blocks_per_core,
        block_rows=block_rows,
    )

    partials = pl.pallas_call(
        kernel,
        out_shape=jax.ShapeDtypeStruct((num_cores, 1, 1), jnp.float32),
        grid_spec=pltpu.PrefetchScalarGridSpec(
            num_scalar_prefetch=0,
            grid=(num_cores, blocks_per_core),
            in_specs=[
                pl.BlockSpec((block_rows, LANES), in_map),
                pl.BlockSpec((block_rows, LANES), in_map),
            ],
            out_specs=pl.BlockSpec((1, 1, 1), lambda c, i: (c, 0, 0)),
            scratch_shapes=[pltpu.VMEM((block_rows, LANES), jnp.float32)],
        ),
        compiler_params=pltpu.CompilerParams(
            dimension_semantics=("parallel", "arbitrary"),
        ),
    )(x2, y2)

    total = jnp.sum(partials)
    # Each zero-padded lane-alignment element contributes softplus(0) = log(2).
    total = total - jnp.float32(n_pad * LOG2)
    return total / jnp.float32(n_valid)


class BinaryLoss:
    """JAX/Pallas port of the PyTorch BinaryLoss module."""

    def __init__(self, pred_key="pred", target_key="target"):
        self.pred_key = pred_key
        self.target_key = target_key

    def __call__(self, ents):
        loss = bce_with_logits_mean(ents[self.pred_key], ents[self.target_key])
        return (loss, None, None)


if __name__ == "__main__":
    key = jax.random.PRNGKey(0)
    k1, k2 = jax.random.split(key)

    # Small NCHW-shaped logits and probabilistic targets (as BCEWithLogits expects).
    pred = jax.random.normal(k1, (2, 4, 16, 16), dtype=jnp.float32)
    target = jax.random.uniform(k2, (2, 4, 16, 16), dtype=jnp.float32)

    module = BinaryLoss()
    loss, _, _ = module({"pred": pred, "target": target})
    loss = jax.block_until_ready(loss)

    # Pure-JAX reference check of the hot path.
    ref = jnp.mean(
        jnp.maximum(pred, 0.0) - pred * target + jnp.log1p(jnp.exp(-jnp.abs(pred)))
    )
    assert jnp.allclose(loss, ref, rtol=1e-5, atol=1e-6), (loss, ref)

    print("KERNEL_OK")
</pallas_src>

<mosaic_0001>
module attributes {stable_mosaic.version = 11 : i64} {
  func.func @_bce_kernel(%arg0: i32, %arg1: i32, %arg2: memref<16x128xf32, #tpu.memory_space<vmem>>, %arg3: memref<16x128xf32, #tpu.memory_space<vmem>>, %arg4: memref<1x1x1xf32, #tpu.memory_space<vmem>>, %arg5: memref<16x128xf32, #tpu.memory_space<vmem>>) attributes {dimension_semantics = [#tpu.dimension_semantics<parallel>, #tpu.dimension_semantics<arbitrary>], iteration_bounds = array<i64: 1, 1>, scalar_prefetch = 0 : i64, scratch_operands = 1 : i64, tpu.core_type = #tpu.core_type<tc>, window_params = [{transform_indices = @transform_0, window_bounds = array<i64: 16, 128>}, {transform_indices = @transform_1, window_bounds = array<i64: 16, 128>}, {transform_indices = @transform_2, window_bounds = array<i64: 1, 1, 1>}]} {
    %c1_i32 = arith.constant 1 : i32
    %0 = arith.muli %arg0, %c1_i32 : i32
    %1 = arith.addi %0, %arg1 : i32
    %c0_i32 = arith.constant 0 : i32
    %2 = arith.cmpi eq, %arg1, %c0_i32 : i32
    %3 = arith.extui %2 : i1 to i32
    %c0_i32_0 = arith.constant 0 : i32
    %4 = arith.cmpi ne, %3, %c0_i32_0 : i32
    scf.if %4 {
      %cst_11 = arith.constant 0.000000e+00 : f32
      %26 = vector.broadcast %cst_11 : f32 to vector<16x128xf32>
      %c0_12 = arith.constant 0 : index
      %c0_13 = arith.constant 0 : index
      %27 = vector.load %arg5[%c0_12, %c0_13] : memref<16x128xf32, #tpu.memory_space<vmem>>, vector<16x128xf32>
      tpu.vector_store %arg5[%c0_12, %c0_13], %26 {strides = array<i32>} : memref<16x128xf32, #tpu.memory_space<vmem>>, vector<16x128xf32>,
    } else {
    }
    %c0 = arith.constant 0 : index
    %c0_1 = arith.constant 0 : index
    %5 = vector.load %arg2[%c0, %c0_1] : memref<16x128xf32, #tpu.memory_space<vmem>>, vector<16x128xf32>
    %c0_2 = arith.constant 0 : index
    %c0_3 = arith.constant 0 : index
    %6 = vector.load %arg3[%c0_2, %c0_3] : memref<16x128xf32, #tpu.memory_space<vmem>>, vector<16x128xf32>
    %cst = arith.constant 0.000000e+00 : f32
    %7 = vector.broadcast %cst : f32 to vector<16x128xf32>
    %8 = arith.maximumf %5, %7 : vector<16x128xf32>
    %9 = arith.mulf %5, %6 : vector<16x128xf32>
    %10 = arith.subf %8, %9 : vector<16x128xf32>
    %11 = math.absf %5 : vector<16x128xf32>
    %cst_4 = arith.constant 0.000000e+00 : f32
    %12 = vector.broadcast %cst_4 : f32 to vector<16x128xf32>
    %13 = arith.subf %12, %11 : vector<16x128xf32>
    %14 = math.exp %13 : vector<16x128xf32>
    %15 = math.log1p %14 : vector<16x128xf32>
    %16 = arith.addf %10, %15 : vector<16x128xf32>
    %c1_i32_5 = arith.constant 1 : i32
    %17 = arith.cmpi slt, %1, %c1_i32_5 : i32
    %18 = arith.extui %17 : i1 to i32
    %c0_i32_6 = arith.constant 0 : i32
    %19 = arith.cmpi ne, %18, %c0_i32_6 : i32
    scf.if %19 {
      %c0_11 = arith.constant 0 : index
      %c0_12 = arith.constant 0 : index
      %26 = vector.load %arg5[%c0_11, %c0_12] : memref<16x128xf32, #tpu.memory_space<vmem>>, vector<16x128xf32>
      %27 = arith.addf %26, %16 : vector<16x128xf32>
      %c0_13 = arith.constant 0 : index
      %c0_14 = arith.constant 0 : index
      %28 = vector.load %arg5[%c0_13, %c0_14] : memref<16x128xf32, #tpu.memory_space<vmem>>, vector<16x128xf32>
      tpu.vector_store %arg5[%c0_13, %c0_14], %27 {strides = array<i32>} : memref<16x128xf32, #tpu.memory_space<vmem>>, vector<16x128xf32>,
    } else {
    }
    %c1_i32_7 = arith.constant 1 : i32
    %20 = arith.cmpi sge, %1, %c1_i32_7 : i32
    %21 = arith.extui %20 : i1 to i32
    %c0_i32_8 = arith.constant 0 : i32
    %22 = arith.cmpi ne, %21, %c0_i32_8 : i32
    scf.if %22 {
      %26 = tpu.iota {dimensions = array<i32: 0>} : vector<16x128xi32>
      %c16_i32 = arith.constant 16 : i32
      %27 = arith.muli %1, %c16_i32 : i32
      %28 = vector.broadcast %27 : i32 to vector<16x128xi32>
      %29 = arith.addi %28, %26 : vector<16x128xi32>
      %c0_11 = arith.constant 0 : index
      %c0_12 = arith.constant 0 : index
      %30 = vector.load %arg5[%c0_11, %c0_12] : memref<16x128xf32, #tpu.memory_space<vmem>>, vector<16x128xf32>
      %c16_i32_13 = arith.constant 16 : i32
      %31 = vector.broadcast %c16_i32_13 : i32 to vector<16x128xi32>
      %32 = arith.cmpi slt, %29, %31 : vector<16x128xi32>
      %cst_14 = arith.constant 0.000000e+00 : f32
      %33 = vector.broadcast %cst_14 : f32 to vector<16x128xf32>
      %34 = arith.select %32, %16, %33 : vector<16x128xi1>, vector<16x128xf32>
      %35 = arith.addf %30, %34 : vector<16x128xf32>
      %c0_15 = arith.constant 0 : index
      %c0_16 = arith.constant 0 : index
      %36 = vector.load %arg5[%c0_15, %c0_16] : memref<16x128xf32, #tpu.memory_space<vmem>>, vector<16x128xf32>
      tpu.vector_store %arg5[%c0_15, %c0_16], %35 {strides = array<i32>} : memref<16x128xf32, #tpu.memory_space<vmem>>, vector<16x128xf32>,
    } else {
    }
    %c0_i32_9 = arith.constant 0 : i32
    %23 = arith.cmpi eq, %arg1, %c0_i32_9 : i32
    %24 = arith.extui %23 : i1 to i32
    %c0_i32_10 = arith.constant 0 : i32
    %25 = arith.cmpi ne, %24, %c0_i32_10 : i32
    scf.if %25 {
      %c0_11 = arith.constant 0 : index
      %c0_12 = arith.constant 0 : index
      %26 = vector.load %arg5[%c0_11, %c0_12] : memref<16x128xf32, #tpu.memory_space<vmem>>, vector<16x128xf32>
      %27 = vector.shape_cast %26 : vector<16x128xf32> to vector<1x16x128xf32>
      %cst_13 = arith.constant dense<0.000000e+00> : vector<1xf32>
      %28 = vector.multi_reduction <add>, %27, %cst_13 [1, 2] : vector<1x16x128xf32> to vector<1xf32>
      %29 = vector.shape_cast %28 : vector<1xf32> to vector<1x1x1xf32>
      %30 = vector.extract %29[0, 0, 0] : f32 from vector<1x1x1xf32>
      %31 = vector.broadcast %30 : f32 to vector<1x1x1xf32>
      %c0_14 = arith.constant 0 : index
      %c0_15 = arith.constant 0 : index
      %c0_16 = arith.constant 0 : index
      %32 = vector.load %arg4[%c0_14, %c0_15, %c0_16] : memref<1x1x1xf32, #tpu.memory_space<vmem>>, vector<1x1x1xf32>
      tpu.vector_store %arg4[%c0_14, %c0_15, %c0_16], %31 {strides = array<i32>} : memref<1x1x1xf32, #tpu.memory_space<vmem>>, vector<1x1x1xf32>,
    } else {
    }
    return
  }
  func.func @transform_0(%arg0: i32, %arg1: i32) -> (i32, i32) {
    %c1_i32 = arith.constant 1 : i32
    %0 = arith.muli %arg0, %c1_i32 : i32
    %1 = arith.addi %0, %arg1 : i32
    %c0_i32 = arith.constant 0 : i32
    %2 = arith.minsi %1, %c0_i32 : i32
    %c0_i32_0 = arith.constant 0 : i32
    %c0_i32_1 = arith.constant 0 : i32
    return %2, %c0_i32_0 : i32, i32
  }
  func.func @transform_1(%arg0: i32, %arg1: i32) -> (i32, i32) {
    %c1_i32 = arith.constant 1 : i32
    %0 = arith.muli %arg0, %c1_i32 : i32
    %1 = arith.addi %0, %arg1 : i32
    %c0_i32 = arith.constant 0 : i32
    %2 = arith.minsi %1, %c0_i32 : i32
    %c0_i32_0 = arith.constant 0 : i32
    %c0_i32_1 = arith.constant 0 : i32
    return %2, %c0_i32_0 : i32, i32
  }
  func.func @transform_2(%arg0: i32, %arg1: i32) -> (i32, i32, i32) {
    %c0_i32 = arith.constant 0 : i32
    %c0_i32_0 = arith.constant 0 : i32
    %c0_i32_1 = arith.constant 0 : i32
    return %arg0, %c0_i32, %c0_i32_0 : i32, i32, i32
  }
}

</mosaic_0001>

<llo_original>
// kernel: bce_with_logits_mean.1
$region0: #{bce_with_logits_mean.1}
  #allocation0 [shape = 'u32[]', space=smem, size = 0x4, offset = 0x4, fixed_abs, tag = 'smem constant byte address 0x4 - core index']
  #allocation1 [shape = 'u32[144,128]{1,0:T(1,128)}', space=vmem, size = 0x12000, scoped, tag = 'internal scratch']
  #allocation2 [shape = 'f32[16,128]{1,0:T(8,128)}', space=vmem, size = 0x2000, scoped, tag = 'scratch operand']
  %s0 = inlined_call_operand.vmem [shape: f32[16,128], index: 0, kind: input, shape index: {}]
  %s1 = inlined_call_operand.vmem [shape: f32[16,128], index: 1, kind: input, shape index: {}]
  %s2 = inlined_call_operand.hbm [shape: f32[1,1,1], index: 2, kind: output, shape index: {}]
  %s3 = sld [smem:[#allocation0]]
  $region34: #{bce_with_logits_mean.1} parent=0
    _
  %s5 = ssub.s32 1, %s3
  %s6 = scalar_select 0, %s5, %s3
  $region1: #{bce_with_logits_mean.1} parent=0
    #allocation3 [shape = 'u8[512]{0}', space=vmem, size = 0x400, scoped, tag = 'output window, operand 0, single buffered']
    #allocation4 [shape = 's32[1]{0}', space=sflag, size = 0x4, scoped, tag = 'scoped memory for bce_with_logits_mean.1']
    %7 = vsyncpa [#allocation4], 0
    // Predicated region
    $region2: #{bce_with_logits_mean.1} parent=1 // pred_check
      _
    $region3: #{bce_with_logits_mean.1} parent=1 // pred_check_branch
      %9 = sbr.rel (0) target = $region5
    $region4: #{bce_with_logits_mean.1} parent=1 // pred_region
      %s10 = sadd.s32 0, 0
      %p11 = scmp.lt.s32.totalorder %s10, 0
      %s12 = scalar_select %p11, %s10, 0
      %s13 = smul.u32 2, %s12
      %p14 = scmp.lt.s32.totalorder %s13, 1
      %s15 = scalar_select %p14, %s13, 1
      %s16 = smul.addr %s15, 8
      %s17 = scalar_lea.vmem %s0, %s16
      %s18 = sadd.s32 0, 0
      %p19 = scmp.lt.s32.totalorder %s18, 0
      %s20 = scalar_select %p19, %s18, 0
      %s21 = smul.u32 2, %s20
    $region5: #{bce_with_logits_mean.1} parent=1 // pred_fallthru
      _
    // Predicated region
    $region6: #{bce_with_logits_mean.1} parent=1 // pred_check
      _
    $region7: #{bce_with_logits_mean.1} parent=1 // pred_check_branch
      %23 = sbr.rel (0) target = $region9
    $region8: #{bce_with_logits_mean.1} parent=1 // pred_region
      %s24 = sadd.s32 0, 0
      %p25 = scmp.lt.s32.totalorder %s24, 0
      %s26 = scalar_select %p25, %s24, 0
      %s27 = smul.u32 2, %s26
      %p28 = scmp.lt.s32.totalorder %s27, 1
      %s29 = scalar_select %p28, %s27, 1
      %s30 = smul.addr %s29, 8
      %s31 = scalar_lea.vmem %s1, %s30
      %s32 = sadd.s32 0, 0
      %p33 = scmp.lt.s32.totalorder %s32, 0
      %s34 = scalar_select %p33, %s32, 0
      %s35 = smul.u32 2, %s34
    $region9: #{bce_with_logits_mean.1} parent=1 // pred_fallthru
      _
    %s36 = sadd.s32 0, 0
    %p37 = scmp.lt.s32.totalorder %s36, 0
    %s38 = scalar_select %p37, %s36, 0
    %s39 = smul.u32 2, %s38
    %p40 = scmp.lt.s32.totalorder %s39, 1
    %s41 = scalar_select %p40, %s39, 1
    %s42 = smul.addr %s41, 8
    %s43 = scalar_lea.vmem %s0, %s42
    %s44 = sadd.s32 0, 0
    %p45 = scmp.lt.s32.totalorder %s44, 0
    %s46 = scalar_select %p45, %s44, 0
    %s47 = smul.u32 2, %s46
    %p48 = scmp.lt.s32.totalorder %s47, 1
    %s49 = scalar_select %p48, %s47, 1
    %s50 = smul.addr %s49, 8
    %s51 = scalar_lea.vmem %s1, %s50
    %s52 = sadd.s32 0, 0
    %p53 = scmp.lt.s32.totalorder %s52, 0
    %s54 = scalar_select %p53, %s52, 0
    %s55 = smul.u32 2, %s54
    %p56 = scmp.lt.s32.totalorder %s55, 1
    %s57 = scalar_select %p56, %s55, 1
    %s58 = smul.addr %s57, 8
    %s59 = scalar_lea.vmem %s0, %s58
    %s60 = sadd.s32 0, 0
    %p61 = scmp.lt.s32.totalorder %s60, 0
    %s62 = scalar_select %p61, %s60, 0
    %s63 = smul.u32 2, %s62
    %s64 = sadd.s32 0, 0
    %p65 = scmp.lt.s32.totalorder %s64, 0
    %s66 = scalar_select %p65, %s64, 0
    %s67 = smul.u32 2, %s66
    %p68 = scmp.lt.s32.totalorder %s67, 1
    %s69 = scalar_select %p68, %s67, 1
    %s70 = smul.addr %s69, 8
    %s71 = scalar_lea.vmem %s1, %s70
    %s72 = sadd.s32 0, 0
    %p73 = scmp.lt.s32.totalorder %s72, 0
    %s74 = scalar_select %p73, %s72, 0
    %s75 = smul.u32 2, %s74
    %s76 = sadd.s32 0, 0
    %p77 = scmp.eq.s32.totalorder 0, 0
    // Predicated region
    $region10: #{bce_with_logits_mean.1} parent=1 // pred_check
      %p78 = pneg %p77
    $region11: #{bce_with_logits_mean.1} parent=1 // pred_check_branch
      %80 = sbr.rel (%p78) target = $region13
    $region12: #{bce_with_logits_mean.1} parent=1 // pred_region
      %81 = vst [vmem:[#allocation2] sm:$0xff] 0.0
      %82 = vst [vmem:[#allocation2 + $0x8] sm:$0xff] 0.0
    $region13: #{bce_with_logits_mean.1} parent=1 // pred_fallthru
      _
    %v83 = vld [vmem:[%s59] sm:$0xff]
    %v84 = vld [vmem:[%s59 + $0x8] sm:$0xff]
    %v85 = vld [vmem:[%s71] sm:$0xff]
    %v86 = vld [vmem:[%s71 + $0x8] sm:$0xff]
    %v87 = vmax.f32 %v83, 0.0
    %v88 = vmax.f32 %v84, 0.0
    %v89 = vmul.f32 %v83, %v85
    %v90 = vmul.f32 %v84, %v86
    %v91 = vsub.f32 %v87, %v89
    %v92 = vsub.f32 %v88, %v90
    %v93 = vand.u32 2147483647, %v83
    %v94 = vand.u32 2147483647, %v84
    %v95 = vsub.f32 0.0, %v93
    %v96 = vsub.f32 0.0, %v94
    %v97 = vmul.f32 %v95, 1.442695
    %v98 = vpow.pop %v97
    %v99 = vmul.f32 %v96, 1.442695
    %v100 = vpow.pop %v99
    %v101 = vadd.f32 %v98, 1.0
    %v102 = vlog2.pop %v101
    %v103 = vmul.f32 %v102, 0.6931472
    %v104 = vmul.f32 -0.5, %v98
    %v105 = vadd.f32 %v104, 1.0
    %v106 = vmul.f32 %v105, %v98
    %v107 = vand.u32 2147483647, %v98
    %vm108 = vcmp.lt.f32.partialorder %v107, 0.0004427343
    %v109 = vsel %vm108, %v106, %v103
    %v110 = vadd.f32 %v100, 1.0
    %v111 = vlog2.pop %v110
    %v112 = vmul.f32 %v111, 0.6931472
    %v113 = vmul.f32 -0.5, %v100
    %v114 = vadd.f32 %v113, 1.0
    %v115 = vmul.f32 %v114, %v100
    %v116 = vand.u32 2147483647, %v100
    %vm117 = vcmp.lt.f32.partialorder %v116, 0.0004427343
    %v118 = vsel %vm117, %v115, %v112
    %v119 = vadd.f32 %v91, %v109
    %v120 = vadd.f32 %v92, %v118
    %p121 = scmp.lt.s32.totalorder %s76, 1
    // Predicated region
    $region14: #{bce_with_logits_mean.1} parent=1 // pred_check
      %p122 = pneg %p121
    $region15: #{bce_with_logits_mean.1} parent=1 // pred_check_branch
      %124 = sbr.rel (%p122) target = $region17
    $region16: #{bce_with_logits_mean.1} parent=1 // pred_region
      %v125 = vld [vmem:[#allocation2] sm:$0xff]
      %v126 = vld [vmem:[#allocation2 + $0x8] sm:$0xff]
      %v127 = vadd.f32 %v125, %v119
      %v128 = vadd.f32 %v126, %v120
      %129 = vst [vmem:[#allocation2] sm:$0xff] %v127
      %130 = vst [vmem:[#allocation2 + $0x8] sm:$0xff] %v128
    $region17: #{bce_with_logits_mean.1} parent=1 // pred_fallthru
      _
    %p131 = scmp.ge.s32.totalorder %s76, 1
    // Predicated region
    $region18: #{bce_with_logits_mean.1} parent=1 // pred_check
      %p132 = pneg %p131
    $region19: #{bce_with_logits_mean.1} parent=1 // pred_check_branch
      %134 = sbr.rel (%p132) target = $region21
    $region20: #{bce_with_logits_mean.1} parent=1 // pred_region
      %v135 = vlaneseq
      %v136 = vshrl.u32 %v135, 7
      %v137 = vadd.s32 %v136, 8
      %s138 = smul.u32 %s76, 16
      %v139 = vstv %s138
      %v140 = vadd.s32 %v139, %v136
      %v141 = vadd.s32 %v139, %v137
      %v142 = vld [vmem:[#allocation2] sm:$0xff]
      %v143 = vld [vmem:[#allocation2 + $0x8] sm:$0xff]
      %vm144 = vcmp.lt.s32.totalorder %v140, 16
      %vm145 = vcmp.lt.s32.totalorder %v141, 16
      %v146 = vsel %vm144, %v119, 0.0
      %v147 = vsel %vm145, %v120, 0.0
      %v148 = vadd.f32 %v142, %v146
      %v149 = vadd.f32 %v143, %v147
      %150 = vst [vmem:[#allocation2] sm:$0xff] %v148
      %151 = vst [vmem:[#allocation2 + $0x8] sm:$0xff] %v149
    $region21: #{bce_with_logits_mean.1} parent=1 // pred_fallthru
      _
    // Predicated region
    $region22: #{bce_with_logits_mean.1} parent=1 // pred_check
      %p152 = pneg %p77
    $region23: #{bce_with_logits_mean.1} parent=1 // pred_check_branch
      %154 = sbr.rel (%p152) target = $region25
    $region24: #{bce_with_logits_mean.1} parent=1 // pred_region
      %v155 = vld [vmem:[#allocation2] sm:$0xff]
      %v156 = vld [vmem:[#allocation2 + $0x8] sm:$0xff]
      %v157 = vadd.f32 %v155, %v156
      %158 = vadd.xlane.f32.xlu0 %v157
      %v159 = vpop.xlane.xlu0 %158
      %v160 = vrot.slane %v159, 4
      %v161 = vadd.f32 %v159, %v160
      %v162 = vrot.slane %v161, 2
      %v163 = vadd.f32 %v161, %v162
      %v164 = vrot.slane %v163, 1
      %v165 = vadd.f32 %v163, %v164
      %s166 = vtos %v165
      %v167 = vstv %s166
      %vm168 = vcmask 0
      %169 = vst.msk [vmem:[#allocation3] sm:$0x1] %vm168, %v167
    $region25: #{bce_with_logits_mean.1} parent=1 // pred_fallthru
      _
    // Predicated region
    $region26: #{bce_with_logits_mean.1} parent=1 // pred_check
      _
    $region27: #{bce_with_logits_mean.1} parent=1 // pred_check_branch
      %171 = sbr.rel (0) target = $region29
    $region28: #{bce_with_logits_mean.1} parent=1 // pred_region
      %s173 = ssub.s32 16, 16
      %174 = vsyncadd [#allocation4], %s173
      %s176 = sshll.u32 [#allocation3], 4
      %s177 = int_to_ptr.vmem [resolvable:$true] %s176
      %179 = dma.vmem_to_hbm [thread:$0]  %s177, 16, %s2, [#allocation4]
    $region29: #{bce_with_logits_mean.1} parent=1 // pred_fallthru
      _
    // Predicated region
    $region30: #{bce_with_logits_mean.1} parent=1 // pred_check
      _
    $region31: #{bce_with_logits_mean.1} parent=1 // pred_check_branch
      %181 = sbr.rel (0) target = $region33
    $region32: #{bce_with_logits_mean.1} parent=1 // pred_region
      %182 = dma.done [#allocation4], 16
    $region33: #{bce_with_logits_mean.1} parent=1 // pred_fallthru
      _
    %183 = vsyncpa [#allocation4], 1

</llo_original>
